<compile_context>
chip_gen: v6e
topology: v6e:2x2x1
jax: 0.10.0
libtpu: 0.0.40
codegen_flags: <defaults>
</compile_context>

<pallas_src>
import functools

import jax
import jax.numpy as jnp
from jax.experimental import pallas as pl
from jax.experimental.pallas import tpu as pltpu

_SUBLANE = 8
_MAX_BLOCK_B = 1024  # 512-1024 row tiles already reach ~85-86% of HBM roofline


def _round_up(n, m):
    return ((n + m - 1) // m) * m


def _vmem_capacity_bytes():
    """Physical VMEM of the local chip; conservative (v7x = 64 MiB) fallback."""
    try:
        return int(pltpu.get_tpu_info().vmem_capacity_bytes)
    except Exception:  # hardware probe only -- never masks a kernel compile error
        return 64 * 1024 * 1024


def _pipeline_mode_supported():
    """One-time probe: does this Pallas accept pipeline_mode=pl.Buffered(n)?"""
    if not hasattr(pl, "Buffered"):
        return False
    try:
        pl.BlockSpec((8, 128), lambda i: (0, 0), pipeline_mode=pl.Buffered(1))
        return True
    except TypeError:
        return False


def adapter_kernel(x_ref, w1_ref, w2_ref, o_ref, *, compute_dtype):
    """Fused relu(relu(x @ w1) @ w2); one batch tile per grid step."""
    x = x_ref[...]
    if compute_dtype is not None and x.dtype != compute_dtype:
        # In-kernel cast: hidden under the DMA/MXU pipeline instead of costing a
        # separate wrapper-side XLA pass over HBM.
        x = x.astype(compute_dtype)
    h = jnp.dot(x, w1_ref[...], preferred_element_type=jnp.float32)  # MXU, f32 acc
    h = jnp.maximum(h, 0.0)                                          # VPU
    if h.dtype != w2_ref.dtype:
        h = h.astype(w2_ref.dtype)  # only on the narrow-operand path
    y = jnp.dot(h, w2_ref[...], preferred_element_type=jnp.float32)
    o_ref[...] = jnp.maximum(y, 0.0).astype(o_ref.dtype)


def adapter_forward(x, w1, w2, *, block_b=None, use_bf16=True, core_parallel=False):
    """x: [..., C], w1: [C, H], w2: [H, C] -> [..., C]  (H = C // reduction)."""
    *lead, C = x.shape
    H = w1.shape[1]
    assert w1.shape == (C, H) and w2.shape == (H, C)

    out_dtype = x.dtype
    compute_dtype = None
    if use_bf16:
        # Cast only the tiny, grid-resident weights in the wrapper; x is cast
        # inside the kernel so it is read from HBM exactly once (as-is).
        w1 = w1.astype(jnp.bfloat16)
        w2 = w2.astype(jnp.bfloat16)
        if jnp.dtype(x.dtype) != jnp.bfloat16:
            compute_dtype = jnp.bfloat16

    x2 = x.reshape(-1, C)  # metadata-only reshape, no extra HBM pass
    B = x2.shape[0]
    x_item = jnp.dtype(x2.dtype).itemsize
    w_item = jnp.dtype(w1.dtype).itemsize
    out_item = jnp.dtype(out_dtype).itemsize

    # ---- per-generation VMEM budget ---------------------------------------
    cap = _vmem_capacity_bytes()
    gen_limit = int(min(cap - (8 << 20), 110 << 20))  # ~56 MiB v7x, ~110 MiB v5e/v6e
    budget = gen_limit - (8 << 20)                    # headroom for compiler scratch

    pipe_ok = _pipeline_mode_supported()
    weight_bufs = 1 if pipe_ok else 2  # Buffered(1): constant weights single-buffered
    weight_bytes = weight_bufs * 2 * C * H * w_item

    # Per-batch-row VMEM cost (output double-buffer counted in *output* dtype).
    per_row = (2 * C * x_item                                     # x tile, double-buffered
               + 2 * C * out_item                                 # out tile, double-buffered
               + (2 * C if compute_dtype is not None else 0)      # bf16 copy of x
               + 4 * H + (2 * H if compute_dtype is not None else 0)  # h (f32 + bf16 copy)
               + 4 * C)                                           # second-matmul f32 acc

    # ---- pick & rebalance the batch tile -----------------------------------
    if block_b is None:
        avail = budget - weight_bytes
        if avail <= 0:
            # TODO(synk): weights alone exceed the VMEM budget -- needs an
            # H-/K-tiled reduction grid ("arbitrary" axis + pl.when-initialized
            # accumulator) instead of collapsing to 8-row tiles.
            block_b = _SUBLANE
        else:
            block_b = int(min(avail // per_row, _MAX_BLOCK_B))
            block_b = max(_SUBLANE, (block_b // _SUBLANE) * _SUBLANE)
    block_b = int(block_b)

    if B <= block_b:
        block_b = B          # single tile; block dim == full array dim, no 8-alignment needed
        n_tiles = 1
    else:
        # Rebalance: waste < 8 rows per tile instead of up to block_b - 8 total.
        n_tiles = pl.cdiv(B, block_b)
        block_b = _round_up(pl.cdiv(B, n_tiles), _SUBLANE)
        n_tiles = pl.cdiv(B, block_b)

    if core_parallel and n_tiles < 4 and B >= 4 * _SUBLANE:
        # Give each of v7x's two TensorCores >=2 tiles so both still pipeline DMAs.
        block_b = _round_up(pl.cdiv(B, 4), _SUBLANE)
        n_tiles = pl.cdiv(B, block_b)

    grid = (int(n_tiles),)

    vmem_needed = weight_bytes + block_b * per_row
    vmem_limit = int(min(max(2 * vmem_needed, 32 << 20), gen_limit))

    kernel = functools.partial(adapter_kernel, compute_dtype=compute_dtype)
    sem = pltpu.CORE_PARALLEL if core_parallel else "parallel"

    def _specs(use_pipe):
        def spec(shape, index_map, bufs):
            if use_pipe and bufs != 2:
                return pl.BlockSpec(shape, index_map, pipeline_mode=pl.Buffered(bufs))
            return pl.BlockSpec(shape, index_map)

        # Deeper x buffering only when the weight-dominated case forces tiny tiles.
        x_bufs = 3 if (block_b <= 256 and n_tiles > 2) else 2
        return [
            spec((block_b, C), lambda i: (i, 0), x_bufs),  # x
            spec((C, H), lambda i: (0, 0), 1),             # w1 (resident)
            spec((H, C), lambda i: (0, 0), 1),             # w2 (resident)
        ]

    def _call(use_pipe):
        return pl.pallas_call(
            kernel,
            out_shape=jax.ShapeDtypeStruct((B, C), out_dtype),
            grid_spec=pltpu.PrefetchScalarGridSpec(
                num_scalar_prefetch=0,
                grid=grid,
                in_specs=_specs(use_pipe),
                out_specs=pl.BlockSpec((block_b, C), lambda i: (i, 0)),
            ),
            compiler_params=pltpu.CompilerParams(
                dimension_semantics=(sem,),
                vmem_limit_bytes=vmem_limit,
            ),
        )(x2, w1, w2)

    if pipe_ok:
        try:
            out2 = _call(True)
        except (pltpu.LoweringException, NotImplementedError):
            # pipeline_mode rejected by this backend's lowering only; retry with
            # default double-buffered specs. Unrelated errors propagate.
            out2 = _call(False)
    else:
        out2 = _call(False)

    return out2.reshape(*lead, C)


def adapter_reference(x, w1, w2):
    h = jnp.maximum(x @ w1, 0.0)
    return jnp.maximum(h @ w2, 0.0)


if __name__ == "__main__":
    # Shapes implied by the module: x is [batch, c_in]; hidden = c_in // reduction.
    B = 8
    C_IN = 32
    REDUCTION = 4
    HIDDEN = C_IN // REDUCTION

    key = jax.random.PRNGKey(0)
    kx, k1, k2 = jax.random.split(key, 3)

    x = jax.random.normal(kx, (B, C_IN), dtype=jnp.float32)
    # Deterministic "Kaiming-ish" init; stored transposed relative to torch.
    w1 = jax.random.normal(k1, (C_IN, HIDDEN), dtype=jnp.float32) * (1.0 / C_IN) ** 0.5
    w2 = jax.random.normal(k2, (HIDDEN, C_IN), dtype=jnp.float32) * (1.0 / HIDDEN) ** 0.5

    ref = adapter_reference(x, w1, w2)

    # Exact f32-operand path (matches the torch reference tightly).
    out_f32 = jax.block_until_ready(adapter_forward(x, w1, w2, use_bf16=False))
    assert out_f32.shape == (B, C_IN)
    assert jnp.allclose(out_f32, ref, atol=1e-5, rtol=1e-5)

    # Default fast path: bf16 operands (cast in-kernel for x), f32 MXU
    # accumulation, f32 output.
    out_fast = jax.block_until_ready(adapter_forward(x, w1, w2))
    assert out_fast.shape == (B, C_IN)
    assert jnp.allclose(out_fast, ref, atol=5e-2, rtol=5e-2)

    print("KERNEL_OK")
</pallas_src>

<mosaic_0001>
module attributes {stable_mosaic.version = 11 : i64} {
  func.func @adapter_kernel(%arg0: i32, %arg1: memref<8x32xf32, #tpu.memory_space<vmem>>, %arg2: memref<32x8xf32, #tpu.memory_space<vmem>>, %arg3: memref<8x32xf32, #tpu.memory_space<vmem>>, %arg4: memref<8x32xf32, #tpu.memory_space<vmem>>) attributes {dimension_semantics = [#tpu.dimension_semantics<parallel>], iteration_bounds = array<i64: 1>, scalar_prefetch = 0 : i64, scratch_operands = 0 : i64, tpu.core_type = #tpu.core_type<tc>, window_params = [{transform_indices = @transform_0, window_bounds = array<i64: 8, 32>}, {pipeline_mode = #tpu.pipeline_mode<synchronous>, transform_indices = @transform_1, window_bounds = array<i64: 32, 8>}, {pipeline_mode = #tpu.pipeline_mode<synchronous>, transform_indices = @transform_2, window_bounds = array<i64: 8, 32>}, {transform_indices = @transform_3, window_bounds = array<i64: 8, 32>}]} {
    %c0 = arith.constant 0 : index
    %c0_0 = arith.constant 0 : index
    %0 = vector.load %arg1[%c0, %c0_0] : memref<8x32xf32, #tpu.memory_space<vmem>>, vector<8x32xf32>
    %c0_1 = arith.constant 0 : index
    %c0_2 = arith.constant 0 : index
    %1 = vector.load %arg2[%c0_1, %c0_2] : memref<32x8xf32, #tpu.memory_space<vmem>>, vector<32x8xf32>
    %cst = arith.constant dense<0.000000e+00> : vector<8x8xf32>
    %2 = tpu.matmul %0, %1, %cst {dimension_numbers = #tpu.dot_dimension_numbers<[1], [0], [0], [1], [0, 0, 1, 1], [], []>} : vector<8x32xf32>, vector<32x8xf32>, vector<8x8xf32> -> vector<8x8xf32>
    %cst_3 = arith.constant 0.000000e+00 : f32
    %3 = vector.broadcast %cst_3 : f32 to vector<8x8xf32>
    %4 = arith.maximumf %2, %3 : vector<8x8xf32>
    %c0_4 = arith.constant 0 : index
    %c0_5 = arith.constant 0 : index
    %5 = vector.load %arg3[%c0_4, %c0_5] : memref<8x32xf32, #tpu.memory_space<vmem>>, vector<8x32xf32>
    %cst_6 = arith.constant dense<0.000000e+00> : vector<8x32xf32>
    %6 = tpu.matmul %4, %5, %cst_6 {dimension_numbers = #tpu.dot_dimension_numbers<[1], [0], [0], [1], [0, 0, 1, 1], [], []>} : vector<8x8xf32>, vector<8x32xf32>, vector<8x32xf32> -> vector<8x32xf32>
    %cst_7 = arith.constant 0.000000e+00 : f32
    %7 = vector.broadcast %cst_7 : f32 to vector<8x32xf32>
    %8 = arith.maximumf %6, %7 : vector<8x32xf32>
    %c0_8 = arith.constant 0 : index
    %c0_9 = arith.constant 0 : index
    %9 = vector.load %arg4[%c0_8, %c0_9] : memref<8x32xf32, #tpu.memory_space<vmem>>, vector<8x32xf32>
    tpu.vector_store %arg4[%c0_8, %c0_9], %8 {strides = array<i32>} : memref<8x32xf32, #tpu.memory_space<vmem>>, vector<8x32xf32>,
    return
  }
  func.func @transform_0(%arg0: i32) -> (i32, i32) {
    %c0_i32 = arith.constant 0 : i32
    %c0_i32_0 = arith.constant 0 : i32
    return %arg0, %c0_i32 : i32, i32
  }
  func.func @transform_1(%arg0: i32) -> (i32, i32) {
    %c0_i32 = arith.constant 0 : i32
    %c0_i32_0 = arith.constant 0 : i32
    %c0_i32_1 = arith.constant 0 : i32
    return %c0_i32, %c0_i32_0 : i32, i32
  }
  func.func @transform_2(%arg0: i32) -> (i32, i32) {
    %c0_i32 = arith.constant 0 : i32
    %c0_i32_0 = arith.constant 0 : i32
    %c0_i32_1 = arith.constant 0 : i32
    return %c0_i32, %c0_i32_0 : i32, i32
  }
  func.func @transform_3(%arg0: i32) -> (i32, i32) {
    %c0_i32 = arith.constant 0 : i32
    %c0_i32_0 = arith.constant 0 : i32
    return %arg0, %c0_i32 : i32, i32
  }
}

</mosaic_0001>

<llo_original>
// kernel: tpu_custom_call.1
$region0: #{tpu_custom_call.1}
  #allocation0 [shape = 'u32[]', space=smem, size = 0x4, offset = 0x4, fixed_abs, tag = 'smem constant byte address 0x4 - core index']
  #allocation1 [shape = 'u32[144,128]{1,0:T(1,128)}', space=vmem, size = 0x12000, scoped, tag = 'internal scratch']
  %s0 = inlined_call_operand.vmem [shape: f32[8,32], index: 0, kind: input, shape index: {}]
  %s1 = inlined_call_operand.vmem [shape: f32[32,8], index: 1, kind: input, shape index: {}]
  %s2 = inlined_call_operand.vmem [shape: f32[8,32], index: 2, kind: input, shape index: {}]
  %s3 = inlined_call_operand.hbm [shape: f32[8,32], index: 3, kind: output, shape index: {}]
  %s4 = sld [smem:[#allocation0]]
  $region22: #{tpu_custom_call.1} parent=0
    _
  %s6 = ssub.s32 1, %s4
  %s7 = scalar_select 0, %s6, %s4
  $region1: #{tpu_custom_call.1} parent=0
    #allocation2 [shape = 'u8[4096]{0}', space=vmem, size = 0x1000, scoped, tag = 'output window, operand 0, single buffered']
    #allocation3 [shape = 's32[1]{0}', space=sflag, size = 0x4, scoped, tag = 'scoped memory for tpu_custom_call.1']
    %8 = vsyncpa [#allocation3], 0
    // Predicated region
    $region2: #{tpu_custom_call.1} parent=1 // pred_check
      _
    $region3: #{tpu_custom_call.1} parent=1 // pred_check_branch
      %10 = sbr.rel (0) target = $region5
    $region4: #{tpu_custom_call.1} parent=1 // pred_region
      _
    $region5: #{tpu_custom_call.1} parent=1 // pred_fallthru
      _
    // Predicated region
    $region6: #{tpu_custom_call.1} parent=1 // pred_check
      _
    $region7: #{tpu_custom_call.1} parent=1 // pred_check_branch
      %12 = sbr.rel (0) target = $region9
    $region8: #{tpu_custom_call.1} parent=1 // pred_region
      _
    $region9: #{tpu_custom_call.1} parent=1 // pred_fallthru
      _
    // Predicated region
    $region10: #{tpu_custom_call.1} parent=1 // pred_check
      _
    $region11: #{tpu_custom_call.1} parent=1 // pred_check_branch
      %14 = sbr.rel (0) target = $region13
    $region12: #{tpu_custom_call.1} parent=1 // pred_region
      _
    $region13: #{tpu_custom_call.1} parent=1 // pred_fallthru
      _
    %v15 = vld [vmem:[%s0] sm:$0xff]
    %v16 = vld [vmem:[%s1] sm:$0xff]
    %v17 = vld [vmem:[%s1 + $0x8] sm:$0xff]
    %v18 = vld [vmem:[%s1 + $0x10] sm:$0xff]
    %v19 = vld [vmem:[%s1 + $0x18] sm:$0xff]
    %vm20 = vcmask 261120
    %v22 = vsel %vm20, %v15, 0
    %24 = vmatprep.subr.mxu0 0.0
    %25 = vmatpush1.msra.mxu0 0.0
    %26 = vmatprep.subr.mxu0 0.0
    %27 = vmatpush1.msra.mxu0 0.0
    %28 = vmatprep.subr.mxu0 0.0
    %29 = vmatpush1.msra.mxu0 0.0
    %30 = vmatprep.subr.mxu0 0.0
    %31 = vmatpush1.msra.mxu0 0.0
    %32 = vmatprep.subr.mxu0 0.0
    %33 = vmatpush1.msra.mxu0 0.0
    %34 = vmatprep.subr.mxu0 0.0
    %35 = vmatpush1.msra.mxu0 0.0
    %36 = vmatprep.subr.mxu0 0.0
    %37 = vmatpush1.msra.mxu0 0.0
    %38 = vmatprep.subr.mxu0 0.0
    %39 = vmatpush1.msra.mxu0 0.0
    %40 = vmatprep.subr.mxu0 0.0
    %41 = vmatpush1.msra.mxu0 0.0
    %42 = vmatprep.subr.mxu0 0.0
    %43 = vmatpush1.msra.mxu0 0.0
    %44 = vmatprep.subr.mxu0 0.0
    %45 = vmatpush1.msra.mxu0 0.0
    %46 = vmatprep.subr.mxu0 0.0
    %47 = vmatpush1.msra.mxu0 0.0
    %48 = vmatprep.subr.mxu0 0.0
    %49 = vmatpush1.msra.mxu0 %v19
    %50 = vmatprep.subr.mxu0 0.0
    %51 = vmatpush1.msra.mxu0 %v18
    %52 = vmatprep.subr.mxu0 0.0
    %53 = vmatpush1.msra.mxu0 %v17
    %54 = vmatprep.subr.mxu0 0.0
    %55 = vmatpush1.msra.mxu0 %v16
    %56 = vmatprep.subr.mxu0 0.0
    %57 = vmatpush2.msra.mxu0 0.0
    %58 = vmatprep.subr.mxu0 0.0
    %59 = vmatpush2.msra.mxu0 0.0
    %60 = vmatprep.subr.mxu0 0.0
    %61 = vmatpush2.msra.mxu0 0.0
    %62 = vmatprep.subr.mxu0 0.0
    %63 = vmatpush2.msra.mxu0 0.0
    %64 = vmatprep.subr.mxu0 0.0
    %65 = vmatpush2.msra.mxu0 0.0
    %66 = vmatprep.subr.mxu0 0.0
    %67 = vmatpush2.msra.mxu0 0.0
    %68 = vmatprep.subr.mxu0 0.0
    %69 = vmatpush2.msra.mxu0 0.0
    %70 = vmatprep.subr.mxu0 0.0
    %71 = vmatpush2.msra.mxu0 0.0
    %72 = vmatprep.subr.mxu0 0.0
    %73 = vmatpush2.msra.mxu0 0.0
    %74 = vmatprep.subr.mxu0 0.0
    %75 = vmatpush2.msra.mxu0 0.0
    %76 = vmatprep.subr.mxu0 0.0
    %77 = vmatpush2.msra.mxu0 0.0
    %78 = vmatprep.subr.mxu0 0.0
    %79 = vmatpush2.msra.mxu0 0.0
    %80 = vmatprep.subr.mxu0 0.0
    %81 = vmatpush2.msra.mxu0 0.0
    %82 = vmatprep.subr.mxu0 0.0
    %83 = vmatpush2.msra.mxu0 0.0
    %84 = vmatprep.subr.mxu0 0.0
    %85 = vmatpush2.msra.mxu0 0.0
    %86 = vmatprep.subr.mxu0 0.0
    %87 = vmatpush2.msra.mxu0 0.0
    %88 = vmatprep.mubr.f32.mxu0 0.0
    %89 = vmatmul.mubr.f32.gmra.mxu0 %v22
    %v90 = vpop.f32.mrf.mxu0
    %v91 = vadd.f32 0.0, %v90
    %v92 = vpop.f32.mrf.mxu0
    %93 = vdwg.mxu0
    %v94 = vmax.f32 %v91, 0.0
    %v95 = vld [vmem:[%s2] sm:$0xff]
    %vm96 = vcmask 64512
    %v98 = vsel %vm96, %v94, 0
    %100 = vmatprep.subr.mxu0 0.0
    %101 = vmatpush1.msra.mxu0 0.0
    %102 = vmatprep.subr.mxu0 0.0
    %103 = vmatpush1.msra.mxu0 0.0
    %104 = vmatprep.subr.mxu0 0.0
    %105 = vmatpush1.msra.mxu0 0.0
    %106 = vmatprep.subr.mxu0 0.0
    %107 = vmatpush1.msra.mxu0 0.0
    %108 = vmatprep.subr.mxu0 0.0
    %109 = vmatpush1.msra.mxu0 0.0
    %110 = vmatprep.subr.mxu0 0.0
    %111 = vmatpush1.msra.mxu0 0.0
    %112 = vmatprep.subr.mxu0 0.0
    %113 = vmatpush1.msra.mxu0 0.0
    %114 = vmatprep.subr.mxu0 0.0
    %115 = vmatpush1.msra.mxu0 0.0
    %116 = vmatprep.subr.mxu0 0.0
    %117 = vmatpush1.msra.mxu0 0.0
    %118 = vmatprep.subr.mxu0 0.0
    %119 = vmatpush1.msra.mxu0 0.0
    %120 = vmatprep.subr.mxu0 0.0
    %121 = vmatpush1.msra.mxu0 0.0
    %122 = vmatprep.subr.mxu0 0.0
    %123 = vmatpush1.msra.mxu0 0.0
    %124 = vmatprep.subr.mxu0 0.0
    %125 = vmatpush1.msra.mxu0 0.0
    %126 = vmatprep.subr.mxu0 0.0
    %127 = vmatpush1.msra.mxu0 0.0
    %128 = vmatprep.subr.mxu0 0.0
    %129 = vmatpush1.msra.mxu0 0.0
    %130 = vmatprep.subr.mxu0 0.0
    %131 = vmatpush1.msra.mxu0 %v95
    %132 = vmatprep.subr.mxu0 0.0
    %133 = vmatpush2.msra.mxu0 0.0
    %134 = vmatprep.subr.mxu0 0.0
    %135 = vmatpush2.msra.mxu0 0.0
    %136 = vmatprep.subr.mxu0 0.0
    %137 = vmatpush2.msra.mxu0 0.0
    %138 = vmatprep.subr.mxu0 0.0
    %139 = vmatpush2.msra.mxu0 0.0
    %140 = vmatprep.subr.mxu0 0.0
    %141 = vmatpush2.msra.mxu0 0.0
    %142 = vmatprep.subr.mxu0 0.0
    %143 = vmatpush2.msra.mxu0 0.0
    %144 = vmatprep.subr.mxu0 0.0
    %145 = vmatpush2.msra.mxu0 0.0
    %146 = vmatprep.subr.mxu0 0.0
    %147 = vmatpush2.msra.mxu0 0.0
    %148 = vmatprep.subr.mxu0 0.0
    %149 = vmatpush2.msra.mxu0 0.0
    %150 = vmatprep.subr.mxu0 0.0
    %151 = vmatpush2.msra.mxu0 0.0
    %152 = vmatprep.subr.mxu0 0.0
    %153 = vmatpush2.msra.mxu0 0.0
    %154 = vmatprep.subr.mxu0 0.0
    %155 = vmatpush2.msra.mxu0 0.0
    %156 = vmatprep.subr.mxu0 0.0
    %157 = vmatpush2.msra.mxu0 0.0
    %158 = vmatprep.subr.mxu0 0.0
    %159 = vmatpush2.msra.mxu0 0.0
    %160 = vmatprep.subr.mxu0 0.0
    %161 = vmatpush2.msra.mxu0 0.0
    %162 = vmatprep.subr.mxu0 0.0
    %163 = vmatpush2.msra.mxu0 0.0
    %164 = vmatprep.mubr.f32.mxu0 0.0
    %165 = vmatmul.mubr.f32.gmra.mxu0 %v98
    %v166 = vpop.f32.mrf.mxu0
    %v167 = vadd.f32 0.0, %v166
    %v168 = vpop.f32.mrf.mxu0
    %169 = vdwg.mxu0
    %v170 = vmax.f32 %v167, 0.0
    %171 = vst.msk [vmem:[#allocation2] sm:$0xff] %vm20, %v170
    // Predicated region
    $region14: #{tpu_custom_call.1} parent=1 // pred_check
      _
    $region15: #{tpu_custom_call.1} parent=1 // pred_check_branch
      %173 = sbr.rel (0) target = $region17
    $region16: #{tpu_custom_call.1} parent=1 // pred_region
      %s175 = ssub.s32 128, 128
      %176 = vsyncadd [#allocation3], %s175
      %s178 = sshll.u32 [#allocation2], 4
      %s179 = int_to_ptr.vmem [resolvable:$true] %s178
      %181 = dma.vmem_to_hbm [thread:$0]  %s179, 128, %s3, [#allocation3]
    $region17: #{tpu_custom_call.1} parent=1 // pred_fallthru
      _
    // Predicated region
    $region18: #{tpu_custom_call.1} parent=1 // pred_check
      _
    $region19: #{tpu_custom_call.1} parent=1 // pred_check_branch
      %183 = sbr.rel (0) target = $region21
    $region20: #{tpu_custom_call.1} parent=1 // pred_region
      %184 = dma.done [#allocation3], 128
    $region21: #{tpu_custom_call.1} parent=1 // pred_fallthru
      _
    %185 = vsyncpa [#allocation3], 1

</llo_original>
